<compile_context>
chip_gen: v5e
topology: v5e:2x2
jax: 0.10.0
libtpu: 0.0.40
codegen_flags: <defaults>
</compile_context>

<pallas_src>
import functools

import jax
import jax.numpy as jnp
from jax.experimental import pallas as pl
from jax.experimental.pallas import tpu as pltpu


_LANE = 128
_SUBLANE = 8
# Per-pipeline-buffer budget in f32 elements (2 MiB).  Working set:
# 2 streams (x in + out) x 2 buffers x 2 MiB = 8 MiB, plus a few tile-sized
# elementwise temporaries -> comfortably under the 32 MiB scoped-VMEM limit
# requested below on every generation (v5e / v6e / v7x), while >=2 MB tiles
# keep the pipeline at ~85%+ of HBM roofline on the mem-bound chips.
_DEFAULT_MAX_TILE_ELEMS = (2 * 1024 * 1024) // 4
_VMEM_LIMIT_BYTES = 32 * 1024 * 1024


def _round_up(a, b):
    return (a + b - 1) // b * b


def _quantize_block(x, pct, mn, mx):
    """Per element: largest boundary (channel min or random boundary) <= x."""
    pos = pct * (mx - mn) + mn                 # (TC, R-1)  loop-invariant
    out = jnp.broadcast_to(mn, x.shape)        # min is always <= x (hoisted)
    for j in range(pct.shape[-1]):             # small static (unrolled) loop
        b = pos[:, j:j + 1]                    # (TC, 1) lane-select, cheap
        out = jnp.where(b <= x, jnp.maximum(out, b), out)   # cmp + max + select
    return out


def _fused_kernel(x_ref, pct_ref, o_ref):
    """Single pass: per-channel min/max + quantize.  Block = (TC, full HW)."""
    x = x_ref[...].astype(jnp.float32)
    pct = pct_ref[...].astype(jnp.float32)
    mn = jnp.min(x, axis=1, keepdims=True)     # (TC, 1)  XLU cross-lane reduce
    mx = jnp.max(x, axis=1, keepdims=True)     # (TC, 1)
    o_ref[...] = _quantize_block(x, pct, mn, mx).astype(o_ref.dtype)


def _minmax_kernel(x_ref, mn_ref, mx_ref, *, hw_mask):
    """Big-HW pass 1: accumulate per-channel min/max across HW tiles."""
    j = pl.program_id(1)
    x = x_ref[...].astype(jnp.float32)
    if hw_mask is not None:                    # ragged lane tail -> mask
        thw = x_ref.shape[1]
        col = jax.lax.broadcasted_iota(jnp.int32, x.shape, 1) + j * thw
        valid = col < hw_mask
        x_min = jnp.where(valid, x, jnp.inf)
        x_max = jnp.where(valid, x, -jnp.inf)
    else:
        x_min = x
        x_max = x
    tile_min = jnp.min(x_min, axis=1, keepdims=True)
    tile_max = jnp.max(x_max, axis=1, keepdims=True)

    @pl.when(j == 0)
    def _():
        mn_ref[...] = jnp.full(mn_ref.shape, jnp.inf, mn_ref.dtype)
        mx_ref[...] = jnp.full(mx_ref.shape, -jnp.inf, mx_ref.dtype)

    mn_ref[...] = jnp.minimum(mn_ref[...], tile_min)
    mx_ref[...] = jnp.maximum(mx_ref[...], tile_max)


def _quantize_kernel(x_ref, pct_ref, mn_ref, mx_ref, o_ref):
    """Big-HW pass 2: quantize one (TC, THW) tile with precomputed min/max."""
    o_ref[...] = _quantize_block(
        x_ref[...].astype(jnp.float32),
        pct_ref[...].astype(jnp.float32),
        mn_ref[...], mx_ref[...]).astype(o_ref.dtype)


@functools.partial(jax.jit, static_argnames=("region_num", "max_tile_elems"))
def lb_quantization(x, percentiles, region_num,
                    max_tile_elems=_DEFAULT_MAX_TILE_ELEMS):
    """x: (B, c, H, W) float; percentiles: (B*c, region_num-1) uniform [0,1)."""
    B, c, H, W = x.shape
    C = B * c
    HW = H * W
    assert region_num >= 2, "region_num < 2 degenerates to per-channel min"
    assert percentiles.shape == (C, region_num - 1)
    nb = region_num - 1
    x_flat = x.reshape(C, HW)

    quant_cost = pl.CostEstimate(
        flops=(3 * nb + 4) * C * HW, transcendentals=0,
        bytes_accessed=8 * C * HW)

    # Smallest legal channel tile: full C extent if C <= 8, else 8 rows.
    min_rows = C if C <= _SUBLANE else _SUBLANE

    if min_rows * HW <= max_tile_elems:
        # -------- fast path: channel-tiled single pass (full HW per block) ----
        if C * HW <= max_tile_elems:
            tc = C
        else:
            tc = max(_SUBLANE, (max_tile_elems // HW) // _SUBLANE * _SUBLANE)
            tc = min(tc, C)
        grid = (pl.cdiv(C, tc),)
        out_flat = pl.pallas_call(
            _fused_kernel,
            out_shape=jax.ShapeDtypeStruct((C, HW), x.dtype),
            grid=grid,
            in_specs=[
                pl.BlockSpec((tc, HW), lambda i: (i, 0)),
                pl.BlockSpec((tc, nb), lambda i: (i, 0)),
            ],
            out_specs=pl.BlockSpec((tc, HW), lambda i: (i, 0)),
            compiler_params=pltpu.CompilerParams(
                dimension_semantics=("parallel",),
                vmem_limit_bytes=_VMEM_LIMIT_BYTES),
            cost_estimate=quant_cost,
        )(x_flat, percentiles)
        return out_flat.reshape(B, c, H, W)

    # -------- big-HW path: two passes, tiled over both C and HW ---------------
    tcr = C if C <= _SUBLANE else _SUBLANE
    thw = max(_LANE, (max_tile_elems // tcr) // _LANE * _LANE)
    thw = min(thw, _round_up(HW, _LANE))
    n_c = pl.cdiv(C, tcr)
    n_hw = pl.cdiv(HW, thw)
    hw_mask = HW if HW % thw != 0 else None

    # Pass 1: per-channel min / max (reduction axis last, "arbitrary").
    mn, mx = pl.pallas_call(
        functools.partial(_minmax_kernel, hw_mask=hw_mask),
        out_shape=(jax.ShapeDtypeStruct((C, 1), jnp.float32),
                   jax.ShapeDtypeStruct((C, 1), jnp.float32)),
        grid=(n_c, n_hw),
        in_specs=[pl.BlockSpec((tcr, thw), lambda i, j: (i, j))],
        out_specs=(pl.BlockSpec((tcr, 1), lambda i, j: (i, 0)),
                   pl.BlockSpec((tcr, 1), lambda i, j: (i, 0))),
        compiler_params=pltpu.CompilerParams(
            dimension_semantics=("parallel", "arbitrary"),
            vmem_limit_bytes=_VMEM_LIMIT_BYTES),
        cost_estimate=pl.CostEstimate(
            flops=2 * C * HW, transcendentals=0, bytes_accessed=4 * C * HW),
    )(x_flat)

    # Pass 2: quantize, fully parallel over (C, HW) tiles.
    out_flat = pl.pallas_call(
        _quantize_kernel,
        out_shape=jax.ShapeDtypeStruct((C, HW), x.dtype),
        grid=(n_c, n_hw),
        in_specs=[
            pl.BlockSpec((tcr, thw), lambda i, j: (i, j)),
            pl.BlockSpec((tcr, nb), lambda i, j: (i, 0)),
            pl.BlockSpec((tcr, 1), lambda i, j: (i, 0)),
            pl.BlockSpec((tcr, 1), lambda i, j: (i, 0)),
        ],
        out_specs=pl.BlockSpec((tcr, thw), lambda i, j: (i, j)),
        compiler_params=pltpu.CompilerParams(
            dimension_semantics=("parallel", "parallel"),
            vmem_limit_bytes=_VMEM_LIMIT_BYTES),
        cost_estimate=quant_cost,
    )(x_flat, percentiles, mn, mx)
    return out_flat.reshape(B, c, H, W)


def lbq_reference(x, percentiles, region_num):
    """Pure-JAX transliteration of the PyTorch forward (sort/argmax/gather)."""
    B, c, H, W = x.shape
    C = B * c
    EPSILON = 1.0
    xf = x.reshape(C, H * W)
    min_val = xf.min(axis=1)                               # (C,)
    max_val = xf.max(axis=1)                               # (C,)
    pos = percentiles * (max_val - min_val)[:, None] + min_val[:, None]         # (C, R-1)
    right_check = jnp.sort(
        jnp.concatenate([pos, (max_val + EPSILON)[:, None]], axis=1), axis=1)   # (C, R)
    left = jnp.sort(
        jnp.concatenate([min_val[:, None], pos], axis=1), axis=1)               # (C, R)
    xb = xf[:, None, :]                                                          # (C,1,HW)
    inside = (xb < right_check[:, :, None]) & (xb >= left[:, :, None])           # (C,R,HW)
    assert bool(jnp.all(inside.sum(axis=1) == 1))
    rid = jnp.argmax(inside.astype(jnp.int32), axis=1)                           # (C,HW)
    proxy = jnp.take_along_axis(left, rid, axis=1)                               # (C,HW)
    return proxy.astype(x.dtype).reshape(B, c, H, W)


def _run_case(key, B, c, H, W, region_num, **kwargs):
    kx, kp = jax.random.split(key)
    x = jax.random.normal(kx, (B, c, H, W), dtype=jnp.float32)
    # torch.rand equivalent: uniform [0,1), (region_num-1) per channel.
    pct = jax.random.uniform(kp, (B * c, region_num - 1), dtype=jnp.float32)
    out = jax.block_until_ready(lb_quantization(x, pct, region_num, **kwargs))
    ref = lbq_reference(x, pct, region_num)
    assert out.shape == x.shape and out.dtype == x.dtype
    assert bool(jnp.allclose(out, ref, atol=1e-6, rtol=1e-6)), "mismatch vs reference"


if __name__ == "__main__":
    key = jax.random.PRNGKey(0)
    k1, k2, k3 = jax.random.split(key, 3)

    # 1) Default path: B=2, c=4, 16x16, region_num=8 (single channel block).
    _run_case(k1, 2, 4, 16, 16, 8)

    # 2) Force the channel-tiled grid (C=16 split into 8-row tiles).
    _run_case(k2, 4, 4, 16, 16, 8, max_tile_elems=8 * 256)

    # 3) Force the two-pass big-HW path with a ragged lane tail (HW=144).
    _run_case(k3, 2, 3, 12, 12, 8, max_tile_elems=512)

    print("KERNEL_OK")
</pallas_src>

<mosaic_0001>
module attributes {stable_mosaic.version = 11 : i64} {
  func.func @_fused_kernel(%arg0: i32, %arg1: memref<8x256xf32, #tpu.memory_space<vmem>>, %arg2: memref<8x7xf32, #tpu.memory_space<vmem>>, %arg3: memref<8x256xf32, #tpu.memory_space<vmem>>) attributes {dimension_semantics = [#tpu.dimension_semantics<parallel>], iteration_bounds = array<i64: 1>, scalar_prefetch = 0 : i64, scratch_operands = 0 : i64, tpu.core_type = #tpu.core_type<tc>, window_params = [{transform_indices = @transform_0, window_bounds = array<i64: 8, 256>}, {transform_indices = @transform_1, window_bounds = array<i64: 8, 7>}, {transform_indices = @transform_2, window_bounds = array<i64: 8, 256>}]} {
    %c0 = arith.constant 0 : index
    %c0_0 = arith.constant 0 : index
    %0 = vector.load %arg1[%c0, %c0_0] : memref<8x256xf32, #tpu.memory_space<vmem>>, vector<8x256xf32>
    %c0_1 = arith.constant 0 : index
    %c0_2 = arith.constant 0 : index
    %1 = vector.load %arg2[%c0_1, %c0_2] : memref<8x7xf32, #tpu.memory_space<vmem>>, vector<8x7xf32>
    %cst = arith.constant dense<0x7F800000> : vector<8xf32>
    %2 = vector.multi_reduction <minimumf>, %0, %cst [1] : vector<8x256xf32> to vector<8xf32>
    %3 = vector.shape_cast %2 : vector<8xf32> to vector<8x1xf32>
    %cst_3 = arith.constant dense<0xFF800000> : vector<8xf32>
    %4 = vector.multi_reduction <maximumf>, %0, %cst_3 [1] : vector<8x256xf32> to vector<8xf32>
    %5 = vector.shape_cast %4 : vector<8xf32> to vector<8x1xf32>
    %6 = arith.subf %5, %3 : vector<8x1xf32>
    %7 = vector.broadcast %6 : vector<8x1xf32> to vector<8x7xf32>
    %8 = arith.mulf %1, %7 : vector<8x7xf32>
    %9 = vector.broadcast %3 : vector<8x1xf32> to vector<8x7xf32>
    %10 = arith.addf %8, %9 : vector<8x7xf32>
    %11 = vector.shape_cast %3 : vector<8x1xf32> to vector<8x1xf32>
    %12 = vector.broadcast %11 : vector<8x1xf32> to vector<8x256xf32>
    %13 = vector.extract_strided_slice %10 {offsets = [0, 0], sizes = [8, 1], strides = [1, 1]} : vector<8x7xf32> to vector<8x1xf32>
    %14 = vector.broadcast %13 : vector<8x1xf32> to vector<8x256xf32>
    %15 = arith.cmpf ole, %14, %0 : vector<8x256xf32>
    %16 = vector.broadcast %13 : vector<8x1xf32> to vector<8x256xf32>
    %17 = arith.maximumf %12, %16 : vector<8x256xf32>
    %18 = arith.select %15, %17, %12 : vector<8x256xi1>, vector<8x256xf32>
    %19 = vector.extract_strided_slice %10 {offsets = [0, 1], sizes = [8, 1], strides = [1, 1]} : vector<8x7xf32> to vector<8x1xf32>
    %20 = vector.broadcast %19 : vector<8x1xf32> to vector<8x256xf32>
    %21 = arith.cmpf ole, %20, %0 : vector<8x256xf32>
    %22 = vector.broadcast %19 : vector<8x1xf32> to vector<8x256xf32>
    %23 = arith.maximumf %18, %22 : vector<8x256xf32>
    %24 = arith.select %21, %23, %18 : vector<8x256xi1>, vector<8x256xf32>
    %25 = vector.extract_strided_slice %10 {offsets = [0, 2], sizes = [8, 1], strides = [1, 1]} : vector<8x7xf32> to vector<8x1xf32>
    %26 = vector.broadcast %25 : vector<8x1xf32> to vector<8x256xf32>
    %27 = arith.cmpf ole, %26, %0 : vector<8x256xf32>
    %28 = vector.broadcast %25 : vector<8x1xf32> to vector<8x256xf32>
    %29 = arith.maximumf %24, %28 : vector<8x256xf32>
    %30 = arith.select %27, %29, %24 : vector<8x256xi1>, vector<8x256xf32>
    %31 = vector.extract_strided_slice %10 {offsets = [0, 3], sizes = [8, 1], strides = [1, 1]} : vector<8x7xf32> to vector<8x1xf32>
    %32 = vector.broadcast %31 : vector<8x1xf32> to vector<8x256xf32>
    %33 = arith.cmpf ole, %32, %0 : vector<8x256xf32>
    %34 = vector.broadcast %31 : vector<8x1xf32> to vector<8x256xf32>
    %35 = arith.maximumf %30, %34 : vector<8x256xf32>
    %36 = arith.select %33, %35, %30 : vector<8x256xi1>, vector<8x256xf32>
    %37 = vector.extract_strided_slice %10 {offsets = [0, 4], sizes = [8, 1], strides = [1, 1]} : vector<8x7xf32> to vector<8x1xf32>
    %38 = vector.broadcast %37 : vector<8x1xf32> to vector<8x256xf32>
    %39 = arith.cmpf ole, %38, %0 : vector<8x256xf32>
    %40 = vector.broadcast %37 : vector<8x1xf32> to vector<8x256xf32>
    %41 = arith.maximumf %36, %40 : vector<8x256xf32>
    %42 = arith.select %39, %41, %36 : vector<8x256xi1>, vector<8x256xf32>
    %43 = vector.extract_strided_slice %10 {offsets = [0, 5], sizes = [8, 1], strides = [1, 1]} : vector<8x7xf32> to vector<8x1xf32>
    %44 = vector.broadcast %43 : vector<8x1xf32> to vector<8x256xf32>
    %45 = arith.cmpf ole, %44, %0 : vector<8x256xf32>
    %46 = vector.broadcast %43 : vector<8x1xf32> to vector<8x256xf32>
    %47 = arith.maximumf %42, %46 : vector<8x256xf32>
    %48 = arith.select %45, %47, %42 : vector<8x256xi1>, vector<8x256xf32>
    %49 = vector.extract_strided_slice %10 {offsets = [0, 6], sizes = [8, 1], strides = [1, 1]} : vector<8x7xf32> to vector<8x1xf32>
    %50 = vector.broadcast %49 : vector<8x1xf32> to vector<8x256xf32>
    %51 = arith.cmpf ole, %50, %0 : vector<8x256xf32>
    %52 = vector.broadcast %49 : vector<8x1xf32> to vector<8x256xf32>
    %53 = arith.maximumf %48, %52 : vector<8x256xf32>
    %54 = arith.select %51, %53, %48 : vector<8x256xi1>, vector<8x256xf32>
    %c0_4 = arith.constant 0 : index
    %c0_5 = arith.constant 0 : index
    %55 = vector.load %arg3[%c0_4, %c0_5] : memref<8x256xf32, #tpu.memory_space<vmem>>, vector<8x256xf32>
    tpu.vector_store %arg3[%c0_4, %c0_5], %54 {strides = array<i32>} : memref<8x256xf32, #tpu.memory_space<vmem>>, vector<8x256xf32>,
    return
  }
  func.func @transform_0(%arg0: i32) -> (i32, i32) {
    %c0_i32 = arith.constant 0 : i32
    %c0_i32_0 = arith.constant 0 : i32
    return %arg0, %c0_i32 : i32, i32
  }
  func.func @transform_1(%arg0: i32) -> (i32, i32) {
    %c0_i32 = arith.constant 0 : i32
    %c0_i32_0 = arith.constant 0 : i32
    return %arg0, %c0_i32 : i32, i32
  }
  func.func @transform_2(%arg0: i32) -> (i32, i32) {
    %c0_i32 = arith.constant 0 : i32
    %c0_i32_0 = arith.constant 0 : i32
    return %arg0, %c0_i32 : i32, i32
  }
}

</mosaic_0001>

<llo_original>
// kernel: lb_quantization.1
$region0: #{lb_quantization.1}
  #allocation0 [shape = 'u32[]', space=smem, size = 0x4, offset = 0x4, fixed_abs, tag = 'smem constant byte address 0x4 - core index']
  #allocation1 [shape = 'u32[72,128]{1,0:T(1,128)}', space=vmem, size = 0x9000, scoped, tag = 'internal scratch']
  %s0 = inlined_call_operand.vmem [shape: f32[8,256], index: 0, kind: input, shape index: {}]
  %s1 = inlined_call_operand.vmem [shape: f32[8,7], index: 1, kind: input, shape index: {}]
  %s2 = inlined_call_operand.vmem [shape: f32[8,256], index: 2, kind: output, shape index: {}]
  %s3 = sld [smem:[#allocation0]]
  $region18: #{lb_quantization.1} parent=0
    _
  %s5 = ssub.s32 1, %s3
  %s6 = scalar_select 0, %s5, %s3
  // Predicated region
  $region2: #{lb_quantization.1} parent=0 // pred_check
    _
  $region3: #{lb_quantization.1} parent=0 // pred_check_branch
    %8 = sbr.rel (0) target = $region5
  $region4: #{lb_quantization.1} parent=0 // pred_region
    _
  $region5: #{lb_quantization.1} parent=0 // pred_fallthru
    _
  // Predicated region
  $region6: #{lb_quantization.1} parent=0 // pred_check
    _
  $region7: #{lb_quantization.1} parent=0 // pred_check_branch
    %10 = sbr.rel (0) target = $region9
  $region8: #{lb_quantization.1} parent=0 // pred_region
    _
  $region9: #{lb_quantization.1} parent=0 // pred_fallthru
    _
  %v11 = vld [vmem:[%s0] sm:$0xff]
  %v12 = vld [vmem:[%s0 + $0x8] sm:$0xff]
  %v13 = vld [vmem:[%s1] sm:$0xff]
  %v14 = vmin.f32 %v11, %v12
  %15 = vmin.xlane.f32.xlu0 %v14
  %v16 = vpop.xlane.xlu0 %15
  %v17 = vmax.f32 %v11, %v12
  %18 = vmax.xlane.f32.xlu0 %v17
  %v19 = vpop.xlane.xlu0 %18
  %v20 = vsub.f32 %v19, %v16
  %v21 = vmul.f32 %v13, %v20
  %v22 = vadd.f32 %v21, %v16
  %24 = vset.pattern.permute.xlu0 0
  %25 = vperm.xlu0 %24, %v22
  %v26 = vpop.permute.xlu0 %25
  %vm28 = vcmp.le.f32.partialorder %v26, %v11
  %vm29 = vcmp.le.f32.partialorder %v26, %v12
  %v30 = vmax.f32 %v16, %v26
  %v31 = vsel %vm28, %v30, %v16
  %v32 = vsel %vm29, %v30, %v16
  %33 = vset.pattern.permute.xlu0 1
  %34 = vperm.xlu0 %33, %v22
  %v35 = vpop.permute.xlu0 %34
  %vm37 = vcmp.le.f32.partialorder %v35, %v11
  %vm38 = vcmp.le.f32.partialorder %v35, %v12
  %v39 = vmax.f32 %v31, %v35
  %v40 = vmax.f32 %v32, %v35
  %v41 = vsel %vm37, %v39, %v31
  %v42 = vsel %vm38, %v40, %v32
  %43 = vset.pattern.permute.xlu0 2
  %44 = vperm.xlu0 %43, %v22
  %v45 = vpop.permute.xlu0 %44
  %vm47 = vcmp.le.f32.partialorder %v45, %v11
  %vm48 = vcmp.le.f32.partialorder %v45, %v12
  %v49 = vmax.f32 %v41, %v45
  %v50 = vmax.f32 %v42, %v45
  %v51 = vsel %vm47, %v49, %v41
  %v52 = vsel %vm48, %v50, %v42
  %53 = vset.pattern.permute.xlu0 3
  %54 = vperm.xlu0 %53, %v22
  %v55 = vpop.permute.xlu0 %54
  %vm57 = vcmp.le.f32.partialorder %v55, %v11
  %vm58 = vcmp.le.f32.partialorder %v55, %v12
  %v59 = vmax.f32 %v51, %v55
  %v60 = vmax.f32 %v52, %v55
  %v61 = vsel %vm57, %v59, %v51
  %v62 = vsel %vm58, %v60, %v52
  %63 = vset.pattern.permute.xlu0 4
  %64 = vperm.xlu0 %63, %v22
  %v65 = vpop.permute.xlu0 %64
  %vm67 = vcmp.le.f32.partialorder %v65, %v11
  %vm68 = vcmp.le.f32.partialorder %v65, %v12
  %v69 = vmax.f32 %v61, %v65
  %v70 = vmax.f32 %v62, %v65
  %v71 = vsel %vm67, %v69, %v61
  %v72 = vsel %vm68, %v70, %v62
  %73 = vset.pattern.permute.xlu0 5
  %74 = vperm.xlu0 %73, %v22
  %v75 = vpop.permute.xlu0 %74
  %vm77 = vcmp.le.f32.partialorder %v75, %v11
  %vm78 = vcmp.le.f32.partialorder %v75, %v12
  %v79 = vmax.f32 %v71, %v75
  %v80 = vmax.f32 %v72, %v75
  %v81 = vsel %vm77, %v79, %v71
  %v82 = vsel %vm78, %v80, %v72
  %83 = vset.pattern.permute.xlu0 6
  %84 = vperm.xlu0 %83, %v22
  %v85 = vpop.permute.xlu0 %84
  %vm87 = vcmp.le.f32.partialorder %v85, %v11
  %vm88 = vcmp.le.f32.partialorder %v85, %v12
  %v89 = vmax.f32 %v81, %v85
  %v90 = vmax.f32 %v82, %v85
  %v91 = vsel %vm87, %v89, %v81
  %v92 = vsel %vm88, %v90, %v82
  %93 = vst [vmem:[%s2] sm:$0xff] %v91
  %94 = vst [vmem:[%s2 + $0x8] sm:$0xff] %v92
  // Predicated region
  $region10: #{lb_quantization.1} parent=0 // pred_check
    _
  $region11: #{lb_quantization.1} parent=0 // pred_check_branch
    %96 = sbr.rel (0) target = $region13
  $region12: #{lb_quantization.1} parent=0 // pred_region
    _
  $region13: #{lb_quantization.1} parent=0 // pred_fallthru
    _
  // Predicated region
  $region14: #{lb_quantization.1} parent=0 // pred_check
    _
  $region15: #{lb_quantization.1} parent=0 // pred_check_branch
    %98 = sbr.rel (0) target = $region17
  $region16: #{lb_quantization.1} parent=0 // pred_region
    _
  $region17: #{lb_quantization.1} parent=0 // pred_fallthru
    _

</llo_original>
